<compile_context>
chip_gen: v7x
topology: tpu7x:2x2x1
jax: 0.10.0
libtpu: 0.0.40
codegen_flags: <defaults>
</compile_context>

<pallas_src>
import functools

import jax
import jax.numpy as jnp
from jax.experimental import pallas as pl
from jax.experimental.pallas import tpu as pltpu

_NSUMS = 10     # number of scalar reductions produced per tile
_SUM_ROWS = 16  # padded to a multiple of 8 sublanes for a clean layout


def _bce_with_logits(x, y):
    # matches torch.nn.functional.binary_cross_entropy_with_logits (stable form)
    return jnp.maximum(x, 0.0) - x * y + jnp.log(1.0 + jnp.exp(-jnp.abs(x)))


def _db_loss_kernel(preds_ref, gt_shr_ref, shr_mask_ref, gt_thr_ref,
                    thr_mask_ref, neg_prob_ref, neg_bi_ref, partials_ref,
                    *, num_cat):
    """Per-tile elementwise math + sublane-reduced partial sums.

    preds_ref    : (C, TH, W) f32   all heads; channels indexed in-kernel
    gt_shr_ref   : (TH, W)    i32   category labels (0 = ignore)
    masks / thr  : (TH, W)    f32
    neg_*_ref    : (TH, W)    f32   masked negative-BCE maps (for top-k)
    partials_ref : (16, W)    f32   rows 0..9 = lane-wise partial sums
    """
    pred_prob = preds_ref[0]
    pred_thr = preds_ref[1]
    pred_bi = preds_ref[2]
    cat = preds_ref[pl.ds(3, num_cat)]                 # (K, TH, W), one load

    gt_shr = gt_shr_ref[...]
    shr_mask = shr_mask_ref[...].astype(jnp.float32)
    gt_thr = gt_thr_ref[...].astype(jnp.float32)
    thr_mask = thr_mask_ref[...].astype(jnp.float32)

    def rsum(x):             # sublane-reduce only; lane reduction happens in JAX
        return jnp.sum(x, axis=0, keepdims=True)       # (1, W)

    # ---- balanced BCE (prob head, mask == 1) ----
    bce_prob = _bce_with_logits(pred_prob, shr_mask)
    pos1 = shr_mask
    neg1 = 1.0 - shr_mask
    neg_prob_ref[...] = bce_prob * neg1

    # ---- balanced BCE (binary head, mask == gt_thr_mask) ----
    bce_bi = _bce_with_logits(pred_bi, shr_mask)
    pos2 = shr_mask * thr_mask
    neg2 = neg1 * thr_mask
    neg_bi_ref[...] = bce_bi * neg2

    # ---- cross entropy over category channels (ignore_index = 0) ----
    m = cat[0]
    for k in range(1, num_cat):          # num_cat is small & static -> unrolled
        m = jnp.maximum(m, cat[k])
    se = jnp.zeros_like(m)
    x_t = jnp.zeros_like(m)
    for k in range(num_cat):
        se = se + jnp.exp(cat[k] - m)
        x_t = x_t + jnp.where(gt_shr == k, cat[k], 0.0)
    nll = m + jnp.log(se) - x_t
    valid = (gt_shr != 0).astype(jnp.float32)

    rows = [
        rsum(pos1),                                      # 0 pos count (prob)
        rsum(neg1),                                      # 1 neg count (prob)
        rsum(bce_prob * pos1),                           # 2 pos BCE sum (prob)
        rsum(pos2),                                      # 3 pos count (binary)
        rsum(neg2),                                      # 4 neg count (binary)
        rsum(bce_bi * pos2),                             # 5 pos BCE sum (binary)
        rsum(jnp.abs((pred_thr - gt_thr) * thr_mask)),   # 6 L1 sum
        rsum(thr_mask),                                  # 7 thr-mask sum
        rsum(nll * valid),                               # 8 NLL sum
        rsum(valid),                                     # 9 valid count
    ]
    w = partials_ref.shape[1]
    pad = jnp.zeros((_SUM_ROWS - _NSUMS, w), jnp.float32)
    # one full, unmasked lane-dense store instead of 11 single-sublane stores
    partials_ref[...] = jnp.concatenate(rows + [pad], axis=0)


def _pick_tile_rows(h2, w2, c, budget_bytes=16 * 1024 * 1024):
    """Largest row-tile keeping double-buffered VMEM under `budget_bytes`.

    Must divide h2 and (unless it spans all of h2) be a multiple of 8 so the
    (sublane, lane) tiling constraint holds on every TPU generation.
    """
    # per row: C pred channels + 4 gt/mask inputs + 2 output maps (+ slack),
    # f32, x2 for double buffering.
    bytes_per_row = w2 * 4 * (c + 8) * 2
    cap = max(1, budget_bytes // bytes_per_row)
    if h2 <= cap:
        return h2
    best = None
    d = 8
    while d <= cap:
        if h2 % d == 0:
            best = d
        d += 8
    # TODO(synk): if h2 has no multiple-of-8 divisor under the cap we fall back
    # to whole-image tiles and rely on vmem_limit_bytes (rare at DBNet sizes).
    return best if best is not None else h2


def db_loss(preds, gt_shr, gt_shr_mask, gt_thr, gt_thr_mask,
            alpha=1.0, beta=1.0, gamma=1.0, negative_ratio=3.0, eps=1e-6,
            max_negatives=None):
    """DBNet loss forward pass. Fully on-device and jittable.

    max_negatives: optional static cap on the balanced-BCE negative pool; when
    set, selection uses jax.lax.top_k(cap) instead of a full N*H*W sort.
    """
    N, C, H, W = preds.shape
    assert C >= 4, "preds needs prob/thr/binary + >=1 category channel"
    K = C - 3
    P = H * W

    # Lane-dense spatial layout: fold (H, W) -> (P//128, 128) when possible.
    if P % 128 == 0:
        H2, W2 = P // 128, 128
    else:
        H2, W2 = H, W

    preds2 = preds.astype(jnp.float32).reshape(N, C, H2, W2)
    gt_shr2 = gt_shr.reshape(N, H2, W2).astype(jnp.int32)
    shr_mask2 = gt_shr_mask.reshape(N, H2, W2).astype(jnp.float32)
    gt_thr2 = gt_thr.reshape(N, H2, W2).astype(jnp.float32)
    thr_mask2 = gt_thr_mask.reshape(N, H2, W2).astype(jnp.float32)
    # TODO(synk): masks/labels could be stored upstream as int8/bf16 to cut HBM
    # read traffic further; the kernel already casts inputs to f32 internally.

    TH = _pick_tile_rows(H2, W2, C)
    n_h = H2 // TH
    grid = (N, n_h)

    n_pix = N * H2 * W2
    cost = pl.CostEstimate(
        flops=int(n_pix * (24 + 8 * K)),
        transcendentals=int(n_pix * (K + 5)),
        bytes_accessed=int(4 * n_pix * (C + 6) + 4 * N * n_h * _SUM_ROWS * W2),
    )

    def map_block():
        return pl.BlockSpec((None, TH, W2), lambda n, h: (n, h, 0))

    neg_prob, neg_bi, partials = pl.pallas_call(
        functools.partial(_db_loss_kernel, num_cat=K),
        grid=grid,
        in_specs=[
            pl.BlockSpec((None, C, TH, W2), lambda n, h: (n, 0, h, 0)),
            map_block(), map_block(), map_block(), map_block(),
        ],
        out_specs=(
            map_block(),
            map_block(),
            pl.BlockSpec((None, None, _SUM_ROWS, W2), lambda n, h: (n, h, 0, 0)),
        ),
        out_shape=(
            jax.ShapeDtypeStruct((N, H2, W2), jnp.float32),
            jax.ShapeDtypeStruct((N, H2, W2), jnp.float32),
            jax.ShapeDtypeStruct((N, n_h, _SUM_ROWS, W2), jnp.float32),
        ),
        compiler_params=pltpu.CompilerParams(
            dimension_semantics=("parallel", "parallel"),
            vmem_limit_bytes=32 * 1024 * 1024,
        ),
        cost_estimate=cost,
    )(preds2, gt_shr2, shr_mask2, gt_thr2, thr_mask2)

    # tiny final cross-lane reduction (10 * N * n_h * W2 elements) in plain JAX
    sums = jnp.sum(partials[:, :, :_NSUMS, :], axis=(0, 1, 3))

    def _balance(pos_cnt_f, neg_cnt_f, pos_loss_sum, neg_loss_map):
        # mirror PyTorch's int() truncation of the (exact-integer) f32 counts
        pos_cnt = jnp.floor(pos_cnt_f)
        neg_cnt = jnp.minimum(jnp.floor(neg_cnt_f),
                              jnp.floor(pos_cnt * negative_ratio))
        flat = neg_loss_map.reshape(-1)
        if max_negatives is not None and max_negatives < flat.shape[0]:
            neg_cnt = jnp.minimum(neg_cnt, jnp.float32(max_negatives))
            vals = jax.lax.top_k(flat, max_negatives)[0]
        else:
            # TODO(synk): dynamic-k top-k (k from tensor values) has no clean
            # Pallas equivalent; full descending sort + masked sum in plain JAX.
            vals = -jnp.sort(-flat)
        idx = jnp.arange(vals.shape[0], dtype=jnp.float32)
        neg_sum = jnp.sum(jnp.where(idx < neg_cnt, vals, 0.0))
        return (pos_loss_sum + neg_sum) / (pos_cnt + neg_cnt + eps)

    loss_prob = _balance(sums[0], sums[1], sums[2], neg_prob)
    loss_bi = _balance(sums[3], sums[4], sums[5], neg_bi)
    loss_thr = sums[6] / (sums[7] + eps)
    loss_cat = sums[8] / jnp.maximum(sums[9], eps)   # guard: no-valid-pixel case

    # TODO(synk): the `downscaled=True` bilinear-interpolate path and the
    # optional CrossEntropyLoss `ce_weight` are not implemented here.
    return dict(loss_prob=loss_prob,
                loss_thr=beta * loss_thr,
                loss_bi=alpha * loss_bi,
                loss_cat=gamma * loss_cat)


def _ref_db_loss(preds, gt_shr, gt_shr_mask, gt_thr, gt_thr_mask,
                 alpha=1.0, beta=1.0, gamma=1.0, negative_ratio=3.0, eps=1e-6):
    # pure-JAX reference mirroring the PyTorch module (host-side int() and all)
    pred_prob = preds[:, 0]
    pred_thr = preds[:, 1]
    pred_bi = preds[:, 2]
    pred_cat = preds[:, 3:]

    def balance(pred, gt, mask):
        positive = gt * mask
        negative = (1.0 - gt) * mask
        pc = int(jnp.sum(positive))
        nc = min(int(jnp.sum(negative)), int(pc * negative_ratio))
        loss = _bce_with_logits(pred, gt)
        pos_sum = jnp.sum(loss * positive)
        srt = -jnp.sort(-(loss * negative).reshape(-1))
        neg_sum = jnp.sum(srt[:nc]) if nc > 0 else jnp.float32(0.0)
        return (pos_sum + neg_sum) / (pc + nc + eps)

    loss_prob = balance(pred_prob, gt_shr_mask, 1.0)
    loss_bi = balance(pred_bi, gt_shr_mask, gt_thr_mask)
    loss_thr = jnp.sum(jnp.abs((pred_thr - gt_thr) * gt_thr_mask)) / (
        jnp.sum(gt_thr_mask) + eps)

    m = jnp.max(pred_cat, axis=1, keepdims=True)
    lse = m + jnp.log(jnp.sum(jnp.exp(pred_cat - m), axis=1, keepdims=True))
    logp = pred_cat - lse
    nll = -jnp.take_along_axis(logp, gt_shr[:, None].astype(jnp.int32), axis=1)[:, 0]
    valid = (gt_shr != 0).astype(jnp.float32)
    loss_cat = jnp.sum(nll * valid) / jnp.sum(valid)

    return dict(loss_prob=loss_prob, loss_thr=beta * loss_thr,
                loss_bi=alpha * loss_bi, loss_cat=gamma * loss_cat)


if __name__ == "__main__":
    key = jax.random.PRNGKey(0)
    kp, ks, km1, kt, km2 = jax.random.split(key, 5)

    # small shapes: batch=2, pred channels=6 (prob/thr/bi + 3 categories), 16x16
    N, C, H, W = 2, 6, 16, 16
    K = C - 3

    preds = jax.random.normal(kp, (N, C, H, W), dtype=jnp.float32)
    gt_shr = jax.random.randint(ks, (N, H, W), 0, K).astype(jnp.int32)   # 0 = ignore
    gt_shr_mask = (jax.random.uniform(km1, (N, H, W)) > 0.5).astype(jnp.float32)
    gt_thr = jax.random.uniform(kt, (N, H, W), dtype=jnp.float32)
    gt_thr_mask = (jax.random.uniform(km2, (N, H, W)) > 0.3).astype(jnp.float32)

    loss_fn = jax.jit(db_loss)   # fully on-device: no host sync inside db_loss
    out = loss_fn(preds, gt_shr, gt_shr_mask, gt_thr, gt_thr_mask)
    out = {k: jax.block_until_ready(v) for k, v in out.items()}

    ref = _ref_db_loss(preds, gt_shr, gt_shr_mask, gt_thr, gt_thr_mask)
    for k in out:
        r = jnp.asarray(ref[k])
        assert jnp.allclose(out[k], r, rtol=3e-4, atol=1e-4), (k, out[k], r)

    print("KERNEL_OK")
</pallas_src>

<mosaic_0001>
module attributes {stable_mosaic.version = 11 : i64} {
  func.func @_db_loss_kernel(%arg0: i32, %arg1: i32, %arg2: memref<1x6x2x128xf32, #tpu.memory_space<vmem>>, %arg3: memref<1x2x128xi32, #tpu.memory_space<vmem>>, %arg4: memref<1x2x128xf32, #tpu.memory_space<vmem>>, %arg5: memref<1x2x128xf32, #tpu.memory_space<vmem>>, %arg6: memref<1x2x128xf32, #tpu.memory_space<vmem>>, %arg7: memref<1x2x128xf32, #tpu.memory_space<vmem>>, %arg8: memref<1x2x128xf32, #tpu.memory_space<vmem>>, %arg9: memref<1x1x16x128xf32, #tpu.memory_space<vmem>>) attributes {dimension_semantics = [#tpu.dimension_semantics<parallel>, #tpu.dimension_semantics<parallel>], iteration_bounds = array<i64: 2, 1>, scalar_prefetch = 0 : i64, scratch_operands = 0 : i64, tpu.core_type = #tpu.core_type<tc>, window_params = [{transform_indices = @transform_0, window_bounds = array<i64: 1, 6, 2, 128>}, {transform_indices = @transform_1, window_bounds = array<i64: 1, 2, 128>}, {transform_indices = @transform_2, window_bounds = array<i64: 1, 2, 128>}, {transform_indices = @transform_3, window_bounds = array<i64: 1, 2, 128>}, {transform_indices = @transform_4, window_bounds = array<i64: 1, 2, 128>}, {transform_indices = @transform_5, window_bounds = array<i64: 1, 2, 128>}, {transform_indices = @transform_6, window_bounds = array<i64: 1, 2, 128>}, {transform_indices = @transform_7, window_bounds = array<i64: 1, 1, 16, 128>}]} {
    %c0 = arith.constant 0 : index
    %c0_0 = arith.constant 0 : index
    %c0_1 = arith.constant 0 : index
    %c0_2 = arith.constant 0 : index
    %0 = vector.load %arg2[%c0, %c0_0, %c0_1, %c0_2] : memref<1x6x2x128xf32, #tpu.memory_space<vmem>>, vector<1x1x2x128xf32>
    %1 = vector.shape_cast %0 : vector<1x1x2x128xf32> to vector<2x128xf32>
    %c0_3 = arith.constant 0 : index
    %c1 = arith.constant 1 : index
    %c0_4 = arith.constant 0 : index
    %c0_5 = arith.constant 0 : index
    %2 = vector.load %arg2[%c0_3, %c1, %c0_4, %c0_5] : memref<1x6x2x128xf32, #tpu.memory_space<vmem>>, vector<1x1x2x128xf32>
    %3 = vector.shape_cast %2 : vector<1x1x2x128xf32> to vector<2x128xf32>
    %c0_6 = arith.constant 0 : index
    %c2 = arith.constant 2 : index
    %c0_7 = arith.constant 0 : index
    %c0_8 = arith.constant 0 : index
    %4 = vector.load %arg2[%c0_6, %c2, %c0_7, %c0_8] : memref<1x6x2x128xf32, #tpu.memory_space<vmem>>, vector<1x1x2x128xf32>
    %5 = vector.shape_cast %4 : vector<1x1x2x128xf32> to vector<2x128xf32>
    %c0_9 = arith.constant 0 : index
    %c3 = arith.constant 3 : index
    %c0_10 = arith.constant 0 : index
    %c0_11 = arith.constant 0 : index
    %6 = vector.load %arg2[%c0_9, %c3, %c0_10, %c0_11] : memref<1x6x2x128xf32, #tpu.memory_space<vmem>>, vector<1x3x2x128xf32>
    %7 = vector.shape_cast %6 : vector<1x3x2x128xf32> to vector<3x2x128xf32>
    %c0_12 = arith.constant 0 : index
    %c0_13 = arith.constant 0 : index
    %c0_14 = arith.constant 0 : index
    %8 = vector.load %arg3[%c0_12, %c0_13, %c0_14] : memref<1x2x128xi32, #tpu.memory_space<vmem>>, vector<1x2x128xi32>
    %9 = vector.shape_cast %8 : vector<1x2x128xi32> to vector<2x128xi32>
    %c0_15 = arith.constant 0 : index
    %c0_16 = arith.constant 0 : index
    %c0_17 = arith.constant 0 : index
    %10 = vector.load %arg4[%c0_15, %c0_16, %c0_17] : memref<1x2x128xf32, #tpu.memory_space<vmem>>, vector<1x2x128xf32>
    %11 = vector.shape_cast %10 : vector<1x2x128xf32> to vector<2x128xf32>
    %c0_18 = arith.constant 0 : index
    %c0_19 = arith.constant 0 : index
    %c0_20 = arith.constant 0 : index
    %12 = vector.load %arg5[%c0_18, %c0_19, %c0_20] : memref<1x2x128xf32, #tpu.memory_space<vmem>>, vector<1x2x128xf32>
    %13 = vector.shape_cast %12 : vector<1x2x128xf32> to vector<2x128xf32>
    %c0_21 = arith.constant 0 : index
    %c0_22 = arith.constant 0 : index
    %c0_23 = arith.constant 0 : index
    %14 = vector.load %arg6[%c0_21, %c0_22, %c0_23] : memref<1x2x128xf32, #tpu.memory_space<vmem>>, vector<1x2x128xf32>
    %15 = vector.shape_cast %14 : vector<1x2x128xf32> to vector<2x128xf32>
    %cst = arith.constant 0.000000e+00 : f32
    %16 = vector.broadcast %cst : f32 to vector<2x128xf32>
    %17 = arith.maximumf %1, %16 : vector<2x128xf32>
    %18 = arith.mulf %1, %11 : vector<2x128xf32>
    %19 = arith.subf %17, %18 : vector<2x128xf32>
    %20 = math.absf %1 : vector<2x128xf32>
    %cst_24 = arith.constant 0.000000e+00 : f32
    %21 = vector.broadcast %cst_24 : f32 to vector<2x128xf32>
    %22 = arith.subf %21, %20 : vector<2x128xf32>
    %23 = math.exp %22 : vector<2x128xf32>
    %cst_25 = arith.constant 1.000000e+00 : f32
    %24 = vector.broadcast %cst_25 : f32 to vector<2x128xf32>
    %25 = arith.addf %24, %23 : vector<2x128xf32>
    %26 = math.log %25 : vector<2x128xf32>
    %27 = arith.addf %19, %26 : vector<2x128xf32>
    %cst_26 = arith.constant 1.000000e+00 : f32
    %28 = vector.broadcast %cst_26 : f32 to vector<2x128xf32>
    %29 = arith.subf %28, %11 : vector<2x128xf32>
    %30 = arith.mulf %27, %29 : vector<2x128xf32>
    %c0_27 = arith.constant 0 : index
    %c0_28 = arith.constant 0 : index
    %c0_29 = arith.constant 0 : index
    %31 = vector.load %arg7[%c0_27, %c0_28, %c0_29] : memref<1x2x128xf32, #tpu.memory_space<vmem>>, vector<1x2x128xf32>
    %32 = vector.shape_cast %31 : vector<1x2x128xf32> to vector<2x128xf32>
    %33 = vector.shape_cast %30 : vector<2x128xf32> to vector<1x2x128xf32>
    tpu.vector_store %arg7[%c0_27, %c0_28, %c0_29], %33 {strides = array<i32>} : memref<1x2x128xf32, #tpu.memory_space<vmem>>, vector<1x2x128xf32>,
    %cst_30 = arith.constant 0.000000e+00 : f32
    %34 = vector.broadcast %cst_30 : f32 to vector<2x128xf32>
    %35 = arith.maximumf %5, %34 : vector<2x128xf32>
    %36 = arith.mulf %5, %11 : vector<2x128xf32>
    %37 = arith.subf %35, %36 : vector<2x128xf32>
    %38 = math.absf %5 : vector<2x128xf32>
    %cst_31 = arith.constant 0.000000e+00 : f32
    %39 = vector.broadcast %cst_31 : f32 to vector<2x128xf32>
    %40 = arith.subf %39, %38 : vector<2x128xf32>
    %41 = math.exp %40 : vector<2x128xf32>
    %cst_32 = arith.constant 1.000000e+00 : f32
    %42 = vector.broadcast %cst_32 : f32 to vector<2x128xf32>
    %43 = arith.addf %42, %41 : vector<2x128xf32>
    %44 = math.log %43 : vector<2x128xf32>
    %45 = arith.addf %37, %44 : vector<2x128xf32>
    %46 = arith.mulf %11, %15 : vector<2x128xf32>
    %47 = arith.mulf %29, %15 : vector<2x128xf32>
    %48 = arith.mulf %45, %47 : vector<2x128xf32>
    %c0_33 = arith.constant 0 : index
    %c0_34 = arith.constant 0 : index
    %c0_35 = arith.constant 0 : index
    %49 = vector.load %arg8[%c0_33, %c0_34, %c0_35] : memref<1x2x128xf32, #tpu.memory_space<vmem>>, vector<1x2x128xf32>
    %50 = vector.shape_cast %49 : vector<1x2x128xf32> to vector<2x128xf32>
    %51 = vector.shape_cast %48 : vector<2x128xf32> to vector<1x2x128xf32>
    tpu.vector_store %arg8[%c0_33, %c0_34, %c0_35], %51 {strides = array<i32>} : memref<1x2x128xf32, #tpu.memory_space<vmem>>, vector<1x2x128xf32>,
    %52 = vector.extract_strided_slice %7 {offsets = [0, 0, 0], sizes = [1, 2, 128], strides = [1, 1, 1]} : vector<3x2x128xf32> to vector<1x2x128xf32>
    %53 = vector.shape_cast %52 : vector<1x2x128xf32> to vector<2x128xf32>
    %54 = vector.extract_strided_slice %7 {offsets = [1, 0, 0], sizes = [1, 2, 128], strides = [1, 1, 1]} : vector<3x2x128xf32> to vector<1x2x128xf32>
    %55 = vector.shape_cast %54 : vector<1x2x128xf32> to vector<2x128xf32>
    %56 = arith.maximumf %53, %55 : vector<2x128xf32>
    %57 = vector.extract_strided_slice %7 {offsets = [2, 0, 0], sizes = [1, 2, 128], strides = [1, 1, 1]} : vector<3x2x128xf32> to vector<1x2x128xf32>
    %58 = vector.shape_cast %57 : vector<1x2x128xf32> to vector<2x128xf32>
    %59 = arith.maximumf %56, %58 : vector<2x128xf32>
    %cst_36 = arith.constant 0.000000e+00 : f32
    %60 = vector.broadcast %cst_36 : f32 to vector<2x128xf32>
    %cst_37 = arith.constant 0.000000e+00 : f32
    %61 = vector.broadcast %cst_37 : f32 to vector<2x128xf32>
    %62 = vector.extract_strided_slice %7 {offsets = [0, 0, 0], sizes = [1, 2, 128], strides = [1, 1, 1]} : vector<3x2x128xf32> to vector<1x2x128xf32>
    %63 = vector.shape_cast %62 : vector<1x2x128xf32> to vector<2x128xf32>
    %64 = arith.subf %63, %59 : vector<2x128xf32>
    %65 = math.exp %64 : vector<2x128xf32>
    %66 = arith.addf %60, %65 : vector<2x128xf32>
    %c0_i32 = arith.constant 0 : i32
    %67 = vector.broadcast %c0_i32 : i32 to vector<2x128xi32>
    %68 = arith.cmpi eq, %9, %67 : vector<2x128xi32>
    %69 = vector.extract_strided_slice %7 {offsets = [0, 0, 0], sizes = [1, 2, 128], strides = [1, 1, 1]} : vector<3x2x128xf32> to vector<1x2x128xf32>
    %70 = vector.shape_cast %69 : vector<1x2x128xf32> to vector<2x128xf32>
    %cst_38 = arith.constant 0.000000e+00 : f32
    %71 = vector.broadcast %cst_38 : f32 to vector<2x128xf32>
    %72 = arith.select %68, %70, %71 : vector<2x128xi1>, vector<2x128xf32>
    %73 = arith.addf %61, %72 : vector<2x128xf32>
    %74 = vector.extract_strided_slice %7 {offsets = [1, 0, 0], sizes = [1, 2, 128], strides = [1, 1, 1]} : vector<3x2x128xf32> to vector<1x2x128xf32>
    %75 = vector.shape_cast %74 : vector<1x2x128xf32> to vector<2x128xf32>
    %76 = arith.subf %75, %59 : vector<2x128xf32>
    %77 = math.exp %76 : vector<2x128xf32>
    %78 = arith.addf %66, %77 : vector<2x128xf32>
    %c1_i32 = arith.constant 1 : i32
    %79 = vector.broadcast %c1_i32 : i32 to vector<2x128xi32>
    %80 = arith.cmpi eq, %9, %79 : vector<2x128xi32>
    %81 = vector.extract_strided_slice %7 {offsets = [1, 0, 0], sizes = [1, 2, 128], strides = [1, 1, 1]} : vector<3x2x128xf32> to vector<1x2x128xf32>
    %82 = vector.shape_cast %81 : vector<1x2x128xf32> to vector<2x128xf32>
    %cst_39 = arith.constant 0.000000e+00 : f32
    %83 = vector.broadcast %cst_39 : f32 to vector<2x128xf32>
    %84 = arith.select %80, %82, %83 : vector<2x128xi1>, vector<2x128xf32>
    %85 = arith.addf %73, %84 : vector<2x128xf32>
    %86 = vector.extract_strided_slice %7 {offsets = [2, 0, 0], sizes = [1, 2, 128], strides = [1, 1, 1]} : vector<3x2x128xf32> to vector<1x2x128xf32>
    %87 = vector.shape_cast %86 : vector<1x2x128xf32> to vector<2x128xf32>
    %88 = arith.subf %87, %59 : vector<2x128xf32>
    %89 = math.exp %88 : vector<2x128xf32>
    %90 = arith.addf %78, %89 : vector<2x128xf32>
    %c2_i32 = arith.constant 2 : i32
    %91 = vector.broadcast %c2_i32 : i32 to vector<2x128xi32>
    %92 = arith.cmpi eq, %9, %91 : vector<2x128xi32>
    %93 = vector.extract_strided_slice %7 {offsets = [2, 0, 0], sizes = [1, 2, 128], strides = [1, 1, 1]} : vector<3x2x128xf32> to vector<1x2x128xf32>
    %94 = vector.shape_cast %93 : vector<1x2x128xf32> to vector<2x128xf32>
    %cst_40 = arith.constant 0.000000e+00 : f32
    %95 = vector.broadcast %cst_40 : f32 to vector<2x128xf32>
    %96 = arith.select %92, %94, %95 : vector<2x128xi1>, vector<2x128xf32>
    %97 = arith.addf %85, %96 : vector<2x128xf32>
    %98 = math.log %90 : vector<2x128xf32>
    %99 = arith.addf %59, %98 : vector<2x128xf32>
    %100 = arith.subf %99, %97 : vector<2x128xf32>
    %c0_i32_41 = arith.constant 0 : i32
    %101 = vector.broadcast %c0_i32_41 : i32 to vector<2x128xi32>
    %102 = arith.cmpi ne, %9, %101 : vector<2x128xi32>
    %103 = arith.extui %102 : vector<2x128xi1> to vector<2x128xi32>
    %104 = arith.sitofp %103 : vector<2x128xi32> to vector<2x128xf32>
    %cst_42 = arith.constant dense<0.000000e+00> : vector<128xf32>
    %105 = vector.multi_reduction <add>, %11, %cst_42 [0] : vector<2x128xf32> to vector<128xf32>
    %106 = vector.shape_cast %105 : vector<128xf32> to vector<1x128xf32>
    %cst_43 = arith.constant dense<0.000000e+00> : vector<128xf32>
    %107 = vector.multi_reduction <add>, %29, %cst_43 [0] : vector<2x128xf32> to vector<128xf32>
    %108 = vector.shape_cast %107 : vector<128xf32> to vector<1x128xf32>
    %109 = arith.mulf %27, %11 : vector<2x128xf32>
    %cst_44 = arith.constant dense<0.000000e+00> : vector<128xf32>
    %110 = vector.multi_reduction <add>, %109, %cst_44 [0] : vector<2x128xf32> to vector<128xf32>
    %111 = vector.shape_cast %110 : vector<128xf32> to vector<1x128xf32>
    %cst_45 = arith.constant dense<0.000000e+00> : vector<128xf32>
    %112 = vector.multi_reduction <add>, %46, %cst_45 [0] : vector<2x128xf32> to vector<128xf32>
    %113 = vector.shape_cast %112 : vector<128xf32> to vector<1x128xf32>
    %cst_46 = arith.constant dense<0.000000e+00> : vector<128xf32>
    %114 = vector.multi_reduction <add>, %47, %cst_46 [0] : vector<2x128xf32> to vector<128xf32>
    %115 = vector.shape_cast %114 : vector<128xf32> to vector<1x128xf32>
    %116 = arith.mulf %45, %46 : vector<2x128xf32>
    %cst_47 = arith.constant dense<0.000000e+00> : vector<128xf32>
    %117 = vector.multi_reduction <add>, %116, %cst_47 [0] : vector<2x128xf32> to vector<128xf32>
    %118 = vector.shape_cast %117 : vector<128xf32> to vector<1x128xf32>
    %119 = arith.subf %3, %13 : vector<2x128xf32>
    %120 = arith.mulf %119, %15 : vector<2x128xf32>
    %121 = math.absf %120 : vector<2x128xf32>
    %cst_48 = arith.constant dense<0.000000e+00> : vector<128xf32>
    %122 = vector.multi_reduction <add>, %121, %cst_48 [0] : vector<2x128xf32> to vector<128xf32>
    %123 = vector.shape_cast %122 : vector<128xf32> to vector<1x128xf32>
    %cst_49 = arith.constant dense<0.000000e+00> : vector<128xf32>
    %124 = vector.multi_reduction <add>, %15, %cst_49 [0] : vector<2x128xf32> to vector<128xf32>
    %125 = vector.shape_cast %124 : vector<128xf32> to vector<1x128xf32>
    %126 = arith.mulf %100, %104 : vector<2x128xf32>
    %cst_50 = arith.constant dense<0.000000e+00> : vector<128xf32>
    %127 = vector.multi_reduction <add>, %126, %cst_50 [0] : vector<2x128xf32> to vector<128xf32>
    %128 = vector.shape_cast %127 : vector<128xf32> to vector<1x128xf32>
    %cst_51 = arith.constant dense<0.000000e+00> : vector<128xf32>
    %129 = vector.multi_reduction <add>, %104, %cst_51 [0] : vector<2x128xf32> to vector<128xf32>
    %130 = vector.shape_cast %129 : vector<128xf32> to vector<1x128xf32>
    %cst_52 = arith.constant 0.000000e+00 : f32
    %131 = vector.broadcast %cst_52 : f32 to vector<6x128xf32>
    %132 = tpu.concatenate %106, %108, %111, %113, %115, %118, %123, %125, %128, %130, %131 in 0 : vector<1x128xf32>, vector<1x128xf32>, vector<1x128xf32>, vector<1x128xf32>, vector<1x128xf32>, vector<1x128xf32>, vector<1x128xf32>, vector<1x128xf32>, vector<1x128xf32>, vector<1x128xf32>, vector<6x128xf32> -> vector<16x128xf32>
    %c0_53 = arith.constant 0 : index
    %c0_54 = arith.constant 0 : index
    %c0_55 = arith.constant 0 : index
    %c0_56 = arith.constant 0 : index
    %133 = vector.load %arg9[%c0_53, %c0_54, %c0_55, %c0_56] : memref<1x1x16x128xf32, #tpu.memory_space<vmem>>, vector<1x1x16x128xf32>
    %134 = vector.shape_cast %133 : vector<1x1x16x128xf32> to vector<16x128xf32>
    %135 = vector.shape_cast %132 : vector<16x128xf32> to vector<1x1x16x128xf32>
    tpu.vector_store %arg9[%c0_53, %c0_54, %c0_55, %c0_56], %135 {strides = array<i32>} : memref<1x1x16x128xf32, #tpu.memory_space<vmem>>, vector<1x1x16x128xf32>,
    return
  }
  func.func @transform_0(%arg0: i32, %arg1: i32) -> (i32, i32, i32, i32) {
    %c0_i32 = arith.constant 0 : i32
    %c0_i32_0 = arith.constant 0 : i32
    %c0_i32_1 = arith.constant 0 : i32
    return %arg0, %c0_i32, %arg1, %c0_i32_0 : i32, i32, i32, i32
  }
  func.func @transform_1(%arg0: i32, %arg1: i32) -> (i32, i32, i32) {
    %c0_i32 = arith.constant 0 : i32
    %c0_i32_0 = arith.constant 0 : i32
    return %arg0, %arg1, %c0_i32 : i32, i32, i32
  }
  func.func @transform_2(%arg0: i32, %arg1: i32) -> (i32, i32, i32) {
    %c0_i32 = arith.constant 0 : i32
    %c0_i32_0 = arith.constant 0 : i32
    return %arg0, %arg1, %c0_i32 : i32, i32, i32
  }
  func.func @transform_3(%arg0: i32, %arg1: i32) -> (i32, i32, i32) {
    %c0_i32 = arith.constant 0 : i32
    %c0_i32_0 = arith.constant 0 : i32
    return %arg0, %arg1, %c0_i32 : i32, i32, i32
  }
  func.func @transform_4(%arg0: i32, %arg1: i32) -> (i32, i32, i32) {
    %c0_i32 = arith.constant 0 : i32
    %c0_i32_0 = arith.constant 0 : i32
    return %arg0, %arg1, %c0_i32 : i32, i32, i32
  }
  func.func @transform_5(%arg0: i32, %arg1: i32) -> (i32, i32, i32) {
    %c0_i32 = arith.constant 0 : i32
    %c0_i32_0 = arith.constant 0 : i32
    return %arg0, %arg1, %c0_i32 : i32, i32, i32
  }
  func.func @transform_6(%arg0: i32, %arg1: i32) -> (i32, i32, i32) {
    %c0_i32 = arith.constant 0 : i32
    %c0_i32_0 = arith.constant 0 : i32
    return %arg0, %arg1, %c0_i32 : i32, i32, i32
  }
  func.func @transform_7(%arg0: i32, %arg1: i32) -> (i32, i32, i32, i32) {
    %c0_i32 = arith.constant 0 : i32
    %c0_i32_0 = arith.constant 0 : i32
    %c0_i32_1 = arith.constant 0 : i32
    return %arg0, %arg1, %c0_i32, %c0_i32_0 : i32, i32, i32, i32
  }
}

</mosaic_0001>

<llo_original>
// kernel: neg.0
$region0: #{neg.0}
  #allocation0 [shape = 's32[1]{0}', space=sflag, size = 0x4, scoped, tag = 'scoped memory for neg.0']
  %s0 = inlined_call_operand.vmem [shape: f32[2,2,128], index: 0, kind: input, shape index: {}]
  %s1 = inlined_call_operand.vmem [shape: f32[2,2,128], index: 1, kind: output, shape index: {}]
  %v2 = vld [vmem:[%s0] sm:$0x3]
  %3 = xla_tuple %v2
  %4 = xla_tuple %3
  %v5 = vxor.u32 %v2, 2147483648
  %6 = xla_tuple %v5
  %7 = vst [vmem:[%s1] sm:$0x3] %v5
  %s8 = scalar_lea.vmem %s0, 2
  %v9 = vld [vmem:[%s8] sm:$0x3]
  %10 = xla_tuple %v9
  %11 = xla_tuple %10
  %v12 = vxor.u32 %v9, 2147483648
  %13 = xla_tuple %v12
  %s14 = scalar_lea.vmem %s1, 2
  %15 = vst [vmem:[%s14] sm:$0x3] %v12

// kernel: db_loss.1
$region0: #{db_loss.1}
  #allocation0 [shape = 'u32[]', space=smem, size = 0x4, offset = 0x4, fixed_abs, tag = 'smem constant byte address 0x4 - core index']
  #allocation1 [shape = 'u32[144,128]{1,0:T(1,128)}', space=vmem, size = 0x12000, scoped, tag = 'internal scratch']
  %s0 = inlined_call_operand.vmem [shape: f32[2,6,2,128], index: 0, kind: input, shape index: {}]
  %s1 = inlined_call_operand.vmem [shape: s32[2,2,128], index: 1, kind: input, shape index: {}]
  %s2 = inlined_call_operand.vmem [shape: f32[2,2,128], index: 2, kind: input, shape index: {}]
  %s3 = inlined_call_operand.vmem [shape: f32[2,2,128], index: 3, kind: input, shape index: {}]
  %s4 = inlined_call_operand.vmem [shape: f32[2,2,128], index: 4, kind: input, shape index: {}]
  %s5 = inlined_call_operand.vmem [shape: f32[2,2,128], index: 5, kind: output, shape index: {0}]
  %s6 = inlined_call_operand.vmem [shape: f32[2,2,128], index: 6, kind: output, shape index: {1}]
  %s7 = inlined_call_operand.vmem [shape: f32[2,1,16,128], index: 7, kind: output, shape index: {2}]
  %8 = xla_tuple %s5, %s6, %s7
  %s9 = sld [smem:[#allocation0]]
  $region69: #{db_loss.1} parent=0
    _
  %s11 = ssub.s32 1, %s9
  %s12 = scalar_select 0, %s11, %s9
  loop: start=0, step=1, limit=4
  $region2: #{db_loss.1} parent=0 // loop_pre_header
    _
  $region3: #{db_loss.1} parent=0 // loop_header
    %s14 = sphi 0, %s18
    %p15 = scmp.ge.s32.totalorder %s14, 4
    %s21 = sphi 0, %s33
    %s22 = sphi 0, %s29
    %s23 = sphi 0, %s21
    %s24 = sphi 0, %s22
    %s25 = sphi 0, %s23
    %s26 = sphi 0, %s24
    %s38 = sphi 0, %s40
    %s41 = sphi 0, %s38
    %s42 = sphi 0, %s41
    %s58 = sphi 0, %s42
    %s66 = sphi 0, %s68
    %s69 = sphi 0, %s66
    %s70 = sphi 0, %s69
    %s86 = sphi 0, %s70
    %s94 = sphi 0, %s96
    %s97 = sphi 0, %s94
    %s98 = sphi 0, %s97
    %s114 = sphi 0, %s98
    %s122 = sphi 0, %s124
    %s125 = sphi 0, %s122
    %s126 = sphi 0, %s125
    %s142 = sphi 0, %s126
    %s150 = sphi 0, %s152
    %s153 = sphi 0, %s150
    %s154 = sphi 0, %s153
    %s170 = sphi 0, %s154
    %s178 = sphi 0, %s180
    %s181 = sphi 0, %s178
    %s182 = sphi 0, %s181
    %s198 = sphi 0, %s182
    %s206 = sphi 0, %s208
    %s209 = sphi 0, %s206
    %s210 = sphi 0, %s209
    %s226 = sphi 0, %s210
    %s234 = sphi 0, %s236
    %s237 = sphi 0, %s234
    %s238 = sphi 0, %s237
    %s254 = sphi 0, %s238
  $region4: #{db_loss.1} parent=0 // loop_header_branch
    %17 = sbr.rel (%p15) target = $region8
  $region5: #{db_loss.1} parent=0 // loop_body
    %s19 = ssub.s32 %s14, 1
    %s20 = ssub.s32 %s14, 2
    %s27 = sadd.s32 1, %s22
    %p28 = scmp.ge.s32.totalorder %s27, 1
    %s29 = scalar_select %p28, 0, %s27
    %s30 = sadd.s32 1, %s21
    %s31 = scalar_select %p28, %s30, %s21
    %p32 = scmp.ge.s32.totalorder %s31, 2
    %s33 = scalar_select %p32, 0, %s31
    %s34 = ssub.s32 %s21, %s33
    %s35 = ssub.s32 %s22, %s29
    %s36 = sor.u32 %s34, %s35
    %p37 = scmp.eq.s32.totalorder %s36, 0
    %s39 = sadd.s32 %s38, 1
    %s40 = scalar_select %p37, %s38, %s39
    %p43 = pneg %p37
    %p44 = scmp.eq.s32.totalorder %s14, 1
    %p45 = por %p43, %p44
    %p46 = scmp.ne.s32.totalorder %s38, %s41
    %p47 = scmp.eq.s32.totalorder %s14, 0
    %p48 = por %p46, %p47
    %p49 = scmp.ne.s32.totalorder %s38, %s41
    %p50 = scmp.eq.s32.totalorder %s19, 1
    %p51 = por %p49, %p50
    %p52 = scmp.ne.s32.totalorder %s41, %s42
    %p53 = scmp.eq.s32.totalorder %s19, 0
    %p54 = por %p52, %p53
    %p55 = scmp.ne.s32.totalorder %s41, %s42
    %p56 = scmp.eq.s32.totalorder %s20, 1
    %p57 = por %p55, %p56
    %p59 = scmp.ne.s32.totalorder %s42, %s58
    %p60 = scmp.eq.s32.totalorder %s20, 0
    %p61 = por %p59, %p60
    %s62 = ssub.s32 %s21, %s33
    %s63 = ssub.s32 %s22, %s29
    %s64 = sor.u32 %s62, %s63
    %p65 = scmp.eq.s32.totalorder %s64, 0
    %s67 = sadd.s32 %s66, 1
    %s68 = scalar_select %p65, %s66, %s67
    %p71 = pneg %p65
    %p72 = scmp.eq.s32.totalorder %s14, 1
    %p73 = por %p71, %p72
    %p74 = scmp.ne.s32.totalorder %s66, %s69
    %p75 = scmp.eq.s32.totalorder %s14, 0
    %p76 = por %p74, %p75
    %p77 = scmp.ne.s32.totalorder %s66, %s69
    %p78 = scmp.eq.s32.totalorder %s19, 1
    %p79 = por %p77, %p78
    %p80 = scmp.ne.s32.totalorder %s69, %s70
    %p81 = scmp.eq.s32.totalorder %s19, 0
    %p82 = por %p80, %p81
    %p83 = scmp.ne.s32.totalorder %s69, %s70
    %p84 = scmp.eq.s32.totalorder %s20, 1
    %p85 = por %p83, %p84
    %p87 = scmp.ne.s32.totalorder %s70, %s86
    %p88 = scmp.eq.s32.totalorder %s20, 0
    %p89 = por %p87, %p88
    %s90 = ssub.s32 %s21, %s33
    %s91 = ssub.s32 %s22, %s29
    %s92 = sor.u32 %s90, %s91
    %p93 = scmp.eq.s32.totalorder %s92, 0
    %s95 = sadd.s32 %s94, 1
    %s96 = scalar_select %p93, %s94, %s95
    %p99 = pneg %p93
    %p100 = scmp.eq.s32.totalorder %s14, 1
    %p101 = por %p99, %p100
    %p102 = scmp.ne.s32.totalorder %s94, %s97
    %p103 = scmp.eq.s32.totalorder %s14, 0
    %p104 = por %p102, %p103
    %p105 = scmp.ne.s32.totalorder %s94, %s97
    %p106 = scmp.eq.s32.totalorder %s19, 1
    %p107 = por %p105, %p106
    %p108 = scmp.ne.s32.totalorder %s97, %s98
    %p109 = scmp.eq.s32.totalorder %s19, 0
    %p110 = por %p108, %p109
    %p111 = scmp.ne.s32.totalorder %s97, %s98
    %p112 = scmp.eq.s32.totalorder %s20, 1
    %p113 = por %p111, %p112
    %p115 = scmp.ne.s32.totalorder %s98, %s114
    %p116 = scmp.eq.s32.totalorder %s20, 0
    %p117 = por %p115, %p116
    %s118 = ssub.s32 %s21, %s33
    %s119 = ssub.s32 %s22, %s29
    %s120 = sor.u32 %s118, %s119
    %p121 = scmp.eq.s32.totalorder %s120, 0
    %s123 = sadd.s32 %s122, 1
    %s124 = scalar_select %p121, %s122, %s123
    %p127 = pneg %p121
    %p128 = scmp.eq.s32.totalorder %s14, 1
    %p129 = por %p127, %p128
    %p130 = scmp.ne.s32.totalorder %s122, %s125
    %p131 = scmp.eq.s32.totalorder %s14, 0
    %p132 = por %p130, %p131
    %p133 = scmp.ne.s32.totalorder %s122, %s125
    %p134 = scmp.eq.s32.totalorder %s19, 1
    %p135 = por %p133, %p134
    %p136 = scmp.ne.s32.totalorder %s125, %s126
    %p137 = scmp.eq.s32.totalorder %s19, 0
    %p138 = por %p136, %p137
    %p139 = scmp.ne.s32.totalorder %s125, %s126
    %p140 = scmp.eq.s32.totalorder %s20, 1
    %p141 = por %p139, %p140
    %p143 = scmp.ne.s32.totalorder %s126, %s142
    %p144 = scmp.eq.s32.totalorder %s20, 0
    %p145 = por %p143, %p144
    %s146 = ssub.s32 %s21, %s33
    %s147 = ssub.s32 %s22, %s29
    %s148 = sor.u32 %s146, %s147
    %p149 = scmp.eq.s32.totalorder %s148, 0
    %s151 = sadd.s32 %s150, 1
    %s152 = scalar_select %p149, %s150, %s151
    %p155 = pneg %p149
    %p156 = scmp.eq.s32.totalorder %s14, 1
    %p157 = por %p155, %p156
    %p158 = scmp.ne.s32.totalorder %s150, %s153
    %p159 = scmp.eq.s32.totalorder %s14, 0
    %p160 = por %p158, %p159
    %p161 = scmp.ne.s32.totalorder %s150, %s153
    %p162 = scmp.eq.s32.totalorder %s19, 1
    %p163 = por %p161, %p162
    %p164 = scmp.ne.s32.totalorder %s153, %s154
    %p165 = scmp.eq.s32.totalorder %s19, 0
    %p166 = por %p164, %p165
    %p167 = scmp.ne.s32.totalorder %s153, %s154
    %p168 = scmp.eq.s32.totalorder %s20, 1
    %p169 = por %p167, %p168
    %p171 = scmp.ne.s32.totalorder %s154, %s170
    %p172 = scmp.eq.s32.totalorder %s20, 0
    %p173 = por %p171, %p172
    %s174 = ssub.s32 %s21, %s33
    %s175 = ssub.s32 %s22, %s29
    %s176 = sor.u32 %s174, %s175
    %p177 = scmp.eq.s32.totalorder %s176, 0
    %s179 = sadd.s32 %s178, 1
    %s180 = scalar_select %p177, %s178, %s179
    %p183 = pneg %p177
    %p184 = scmp.eq.s32.totalorder %s14, 1
    %p185 = por %p183, %p184
    %p186 = scmp.ne.s32.totalorder %s178, %s181
    %p187 = scmp.eq.s32.totalorder %s14, 0
    %p188 = por %p186, %p187
    %p189 = scmp.ne.s32.totalorder %s178, %s181
    %p190 = scmp.eq.s32.totalorder %s19, 1
    %p191 = por %p189, %p190
    %p192 = scmp.ne.s32.totalorder %s181, %s182
    %p193 = scmp.eq.s32.totalorder %s19, 0
    %p194 = por %p192, %p193
    %p195 = scmp.ne.s32.totalorder %s181, %s182
    %p196 = scmp.eq.s32.totalorder %s20, 1
    %p197 = por %p195, %p196
    %p199 = scmp.ne.s32.totalorder %s182, %s198
    %p200 = scmp.eq.s32.totalorder %s20, 0
    %p201 = por %p199, %p200
    %s202 = ssub.s32 %s21, %s33
    %s203 = ssub.s32 %s22, %s29
    %s204 = sor.u32 %s202, %s203
    %p205 = scmp.eq.s32.totalorder %s204, 0
    %s207 = sadd.s32 %s206, 1
    %s208 = scalar_select %p205, %s206, %s207
    %p211 = pneg %p205
    %p212 = scmp.eq.s32.totalorder %s14, 1
    %p213 = por %p211, %p212
    %p214 = scmp.ne.s32.totalorder %s206, %s209
    %p215 = scmp.eq.s32.totalorder %s14, 0
    %p216 = por %p214, %p215
    %p217 = scmp.ne.s32.totalorder %s206, %s209
    %p218 = scmp.eq.s32.totalorder %s19, 1
    %p219 = por %p217, %p218
    %p220 = scmp.ne.s32.totalorder %s209, %s210
    %p221 = scmp.eq.s32.totalorder %s19, 0
    %p222 = por %p220, %p221
    %p223 = scmp.ne.s32.totalorder %s209, %s210
    %p224 = scmp.eq.s32.totalorder %s20, 1
    %p225 = por %p223, %p224
    %p227 = scmp.ne.s32.totalorder %s210, %s226
    %p228 = scmp.eq.s32.totalorder %s20, 0
    %p229 = por %p227, %p228
    %s230 = ssub.s32 %s21, %s33
    %s231 = ssub.s32 %s22, %s29
    %s232 = sor.u32 %s230, %s231
    %p233 = scmp.eq.s32.totalorder %s232, 0
    %s235 = sadd.s32 %s234, 1
    %s236 = scalar_select %p233, %s234, %s235
    %p239 = pneg %p233
    %p240 = scmp.eq.s32.totalorder %s14, 1
    %p241 = por %p239, %p240
    %p242 = scmp.ne.s32.totalorder %s234, %s237
    %p243 = scmp.eq.s32.totalorder %s14, 0
    %p244 = por %p242, %p243
    %p245 = scmp.ne.s32.totalorder %s234, %s237
    %p246 = scmp.eq.s32.totalorder %s19, 1
    %p247 = por %p245, %p246
    %p248 = scmp.ne.s32.totalorder %s237, %s238
    %p249 = scmp.eq.s32.totalorder %s19, 0
    %p250 = por %p248, %p249
    %p251 = scmp.ne.s32.totalorder %s237, %s238
    %p252 = scmp.eq.s32.totalorder %s20, 1
    %p253 = por %p251, %p252
    %p255 = scmp.ne.s32.totalorder %s238, %s254
    %p256 = scmp.eq.s32.totalorder %s20, 0
    %p257 = por %p255, %p256
    %p258 = scmp.le.s32.totalorder 1, %s14
    %p259 = scmp.lt.s32.totalorder %s14, 3
    %p260 = pnand %p258, %p259
    %p261 = pneg %p260
    // Predicated region
    $region9: #{db_loss.1} parent=5 // pred_check
      _
    $region10: #{db_loss.1} parent=5 // pred_check_branch
      %263 = sbr.rel (%p260) target = $region12
    $region11: #{db_loss.1} parent=5 // pred_region
      %s264 = ssub.s32 %s14, 1
    $region12: #{db_loss.1} parent=5 // pred_fallthru
      _
    %p265 = scmp.lt.s32.totalorder %s14, 2
    // Predicated region
    $region13: #{db_loss.1} parent=5 // pred_check
      %p266 = pneg %p265
    $region14: #{db_loss.1} parent=5 // pred_check_branch
      %268 = sbr.rel (%p266) target = $region16
    $region15: #{db_loss.1} parent=5 // pred_region
      // Predicated region
      $region17: #{db_loss.1} parent=15 // pred_check
        %p269 = pneg %p48
      $region18: #{db_loss.1} parent=15 // pred_check_branch
        %271 = sbr.rel (%p269) target = $region20
      $region19: #{db_loss.1} parent=15 // pred_region
        %p272 = scmp.lt.s32.totalorder %s21, 1
        %s273 = scalar_select %p272, %s21, 1
        %p274 = scmp.lt.s32.totalorder %s22, 0
        %s275 = scalar_select %p274, %s22, 0
        %s276 = smul.addr %s273, 6
        %s277 = sadd.s32 %s275, %s276
        %s278 = smul.addr %s277, 2
        %s279 = scalar_lea.vmem %s0, %s278
      $region20: #{db_loss.1} parent=15 // pred_fallthru
        _
      // Predicated region
      $region21: #{db_loss.1} parent=15 // pred_check
        %p280 = pneg %p76
      $region22: #{db_loss.1} parent=15 // pred_check_branch
        %282 = sbr.rel (%p280) target = $region24
      $region23: #{db_loss.1} parent=15 // pred_region
        %p283 = scmp.lt.s32.totalorder %s21, 1
        %s284 = scalar_select %p283, %s21, 1
        %p285 = scmp.lt.s32.totalorder %s22, 0
        %s286 = scalar_select %p285, %s22, 0
        %s287 = sadd.s32 %s286, %s284
        %s288 = smul.addr %s287, 2
        %s289 = scalar_lea.vmem %s1, %s288
      $region24: #{db_loss.1} parent=15 // pred_fallthru
        _
      // Predicated region
      $region25: #{db_loss.1} parent=15 // pred_check
        %p290 = pneg %p104
      $region26: #{db_loss.1} parent=15 // pred_check_branch
        %292 = sbr.rel (%p290) target = $region28
      $region27: #{db_loss.1} parent=15 // pred_region
        %p293 = scmp.lt.s32.totalorder %s21, 1
        %s294 = scalar_select %p293, %s21, 1
        %p295 = scmp.lt.s32.totalorder %s22, 0
        %s296 = scalar_select %p295, %s22, 0
        %s297 = sadd.s32 %s296, %s294
        %s298 = smul.addr %s297, 2
        %s299 = scalar_lea.vmem %s2, %s298
      $region28: #{db_loss.1} parent=15 // pred_fallthru
        _
      // Predicated region
      $region29: #{db_loss.1} parent=15 // pred_check
        %p300 = pneg %p132
      $region30: #{db_loss.1} parent=15 // pred_check_branch
        %302 = sbr.rel (%p300) target = $region32
      $region31: #{db_loss.1} parent=15 // pred_region
        %p303 = scmp.lt.s32.totalorder %s21, 1
        %s304 = scalar_select %p303, %s21, 1
        %p305 = scmp.lt.s32.totalorder %s22, 0
        %s306 = scalar_select %p305, %s22, 0
        %s307 = sadd.s32 %s306, %s304
        %s308 = smul.addr %s307, 2
        %s309 = scalar_lea.vmem %s3, %s308
      $region32: #{db_loss.1} parent=15 // pred_fallthru
        _
      // Predicated region
      $region33: #{db_loss.1} parent=15 // pred_check
        %p310 = pneg %p160
      $region34: #{db_loss.1} parent=15 // pred_check_branch
        %312 = sbr.rel (%p310) target = $region36
      $region35: #{db_loss.1} parent=15 // pred_region
        %p313 = scmp.lt.s32.totalorder %s21, 1
        %s314 = scalar_select %p313, %s21, 1
        %p315 = scmp.lt.s32.totalorder %s22, 0
        %s316 = scalar_select %p315, %s22, 0
        %s317 = sadd.s32 %s316, %s314
        %s318 = smul.addr %s317, 2
        %s319 = scalar_lea.vmem %s4, %s318
      $region36: #{db_loss.1} parent=15 // pred_fallthru
        _
    $region16: #{db_loss.1} parent=5 // pred_fallthru
      _
    %p320 = scmp.le.s32.totalorder 1, %s14
    %p321 = scmp.lt.s32.totalorder %s14, 3
    %p322 = pnand %p320, %p321
    %p323 = pneg %p322
    // Predicated region
    $region37: #{db_loss.1} parent=5 // pred_check
      _
    $region38: #{db_loss.1} parent=5 // pred_check_branch
      %325 = sbr.rel (%p322) target = $region40
    $region39: #{db_loss.1} parent=5 // pred_region
      %s326 = ssub.s32 %s14, 1
      %p327 = scmp.lt.s32.totalorder %s23, 1
      %s328 = scalar_select %p327, %s23, 1
      %p329 = scmp.lt.s32.totalorder %s24, 0
      %s330 = scalar_select %p329, %s24, 0
      %s331 = smul.addr %s328, 6
      %s332 = sadd.s32 %s330, %s331
      %s333 = smul.addr %s332, 2
      %s334 = scalar_lea.vmem %s0, %s333
      %p335 = pneg %p54
      %p336 = pneg %p51
      %p337 = scmp.lt.s32.totalorder %s23, 1
      %s338 = scalar_select %p337, %s23, 1
      %p339 = scmp.lt.s32.totalorder %s24, 0
      %s340 = scalar_select %p339, %s24, 0
      %s341 = sadd.s32 %s340, %s338
      %s342 = smul.addr %s341, 2
      %s343 = scalar_lea.vmem %s1, %s342
      %p344 = pneg %p82
      %p345 = pneg %p79
      %p346 = scmp.lt.s32.totalorder %s23, 1
      %s347 = scalar_select %p346, %s23, 1
      %p348 = scmp.lt.s32.totalorder %s24, 0
      %s349 = scalar_select %p348, %s24, 0
      %s350 = sadd.s32 %s349, %s347
      %s351 = smul.addr %s350, 2
      %s352 = scalar_lea.vmem %s2, %s351
      %p353 = pneg %p110
      %p354 = pneg %p107
      %p355 = scmp.lt.s32.totalorder %s23, 1
      %s356 = scalar_select %p355, %s23, 1
      %p357 = scmp.lt.s32.totalorder %s24, 0
      %s358 = scalar_select %p357, %s24, 0
      %s359 = sadd.s32 %s358, %s356
      %s360 = smul.addr %s359, 2
      %s361 = scalar_lea.vmem %s3, %s360
      %p362 = pneg %p138
      %p363 = pneg %p135
      %p364 = scmp.lt.s32.totalorder %s23, 1
      %s365 = scalar_select %p364, %s23, 1
      %p366 = scmp.lt.s32.totalorder %s24, 0
      %s367 = scalar_select %p366, %s24, 0
      %s368 = sadd.s32 %s367, %s365
      %s369 = smul.addr %s368, 2
      %s370 = scalar_lea.vmem %s4, %s369
      %p371 = pneg %p166
      %p372 = pneg %p163
      %p373 = pneg %p194
      %p374 = pneg %p191
      %p375 = scmp.lt.s32.totalorder %s23, 1
      %s376 = scalar_select %p375, %s23, 1
      %p377 = scmp.lt.s32.totalorder %s24, 0
      %s378 = scalar_select %p377, %s24, 0
      %s379 = sadd.s32 %s378, %s376
      %s380 = smul.addr %s379, 2
      %s381 = scalar_lea.vmem %s5, %s380
      %p382 = pneg %p222
      %p383 = pneg %p219
      %p384 = scmp.lt.s32.totalorder %s23, 1
      %s385 = scalar_select %p384, %s23, 1
      %p386 = scmp.lt.s32.totalorder %s24, 0
      %s387 = scalar_select %p386, %s24, 0
      %s388 = sadd.s32 %s387, %s385
      %s389 = smul.addr %s388, 2
      %s390 = scalar_lea.vmem %s6, %s389
      %p391 = pneg %p250
      %p392 = pneg %p247
      %p393 = scmp.lt.s32.totalorder %s23, 1
      %s394 = scalar_select %p393, %s23, 1
      %p395 = scmp.lt.s32.totalorder %s24, 0
      %s396 = scalar_select %p395, %s24, 0
      %s397 = smul.addr %s396, 2
      %s398 = smul.addr %s394, 2
      %s399 = sadd.s32 %s397, %s398
      %s400 = smul.addr %s399, 8
      %s401 = scalar_lea.vmem %s7, %s400
      %p402 = scmp.lt.s32.totalorder %s23, 1
      %s403 = scalar_select %p402, %s23, 1
      %p404 = scmp.lt.s32.totalorder %s24, 0
      %s405 = scalar_select %p404, %s24, 0
      %s406 = smul.addr %s403, 6
      %s407 = sadd.s32 %s405, %s406
      %s408 = smul.addr %s407, 2
      %s409 = scalar_lea.vmem %s0, %s408
      %p410 = scmp.lt.s32.totalorder %s23, 1
      %s411 = scalar_select %p410, %s23, 1
      %p412 = scmp.lt.s32.totalorder %s24, 0
      %s413 = scalar_select %p412, %s24, 0
      %s414 = sadd.s32 %s413, %s411
      %s415 = smul.addr %s414, 2
      %s416 = scalar_lea.vmem %s1, %s415
      %p417 = scmp.lt.s32.totalorder %s23, 1
      %s418 = scalar_select %p417, %s23, 1
      %p419 = scmp.lt.s32.totalorder %s24, 0
      %s420 = scalar_select %p419, %s24, 0
      %s421 = sadd.s32 %s420, %s418
      %s422 = smul.addr %s421, 2
      %s423 = scalar_lea.vmem %s2, %s422
      %p424 = scmp.lt.s32.totalorder %s23, 1
      %s425 = scalar_select %p424, %s23, 1
      %p426 = scmp.lt.s32.totalorder %s24, 0
      %s427 = scalar_select %p426, %s24, 0
      %s428 = sadd.s32 %s427, %s425
      %s429 = smul.addr %s428, 2
      %s430 = scalar_lea.vmem %s3, %s429
      %p431 = scmp.lt.s32.totalorder %s23, 1
      %s432 = scalar_select %p431, %s23, 1
      %p433 = scmp.lt.s32.totalorder %s24, 0
      %s434 = scalar_select %p433, %s24, 0
      %s435 = sadd.s32 %s434, %s432
      %s436 = smul.addr %s435, 2
      %s437 = scalar_lea.vmem %s4, %s436
      %p438 = scmp.lt.s32.totalorder %s23, 1
      %s439 = scalar_select %p438, %s23, 1
      %p440 = scmp.lt.s32.totalorder %s24, 0
      %s441 = scalar_select %p440, %s24, 0
      %s442 = sadd.s32 %s441, %s439
      %s443 = smul.addr %s442, 2
      %s444 = scalar_lea.vmem %s5, %s443
      %p445 = scmp.lt.s32.totalorder %s23, 1
      %s446 = scalar_select %p445, %s23, 1
      %p447 = scmp.lt.s32.totalorder %s24, 0
      %s448 = scalar_select %p447, %s24, 0
      %s449 = sadd.s32 %s448, %s446
      %s450 = smul.addr %s449, 2
      %s451 = scalar_lea.vmem %s6, %s450
      %p452 = scmp.lt.s32.totalorder %s23, 1
      %s453 = scalar_select %p452, %s23, 1
      %p454 = scmp.lt.s32.totalorder %s24, 0
      %s455 = scalar_select %p454, %s24, 0
      %s456 = smul.addr %s455, 2
      %s457 = smul.addr %s453, 2
      %s458 = sadd.s32 %s456, %s457
      %s459 = smul.addr %s458, 8
      %s460 = scalar_lea.vmem %s7, %s459
      %v461 = vld [vmem:[%s409] sm:$0x3]
      %s462 = scalar_lea.vmem %s409, 2
      %v463 = vld [vmem:[%s462] sm:$0x3]
      %s464 = scalar_lea.vmem %s409, 4
      %v465 = vld [vmem:[%s464] sm:$0x3]
      %s466 = scalar_lea.vmem %s409, 6
      %v467 = vld [vmem:[%s466] sm:$0x3]
      %v468 = vld [vmem:[%s466 + $0x2] sm:$0x3]
      %v469 = vld [vmem:[%s466 + $0x4] sm:$0x3]
      %v470 = vld [vmem:[%s416] sm:$0x3]
      %v471 = vld [vmem:[%s423] sm:$0x3]
      %v472 = vld [vmem:[%s430] sm:$0x3]
      %v473 = vld [vmem:[%s437] sm:$0x3]
      %v474 = vmax.f32 %v461, 0.0
      %v475 = vmul.f32 %v461, %v471
      %v476 = vsub.f32 %v474, %v475
      %v477 = vand.u32 2147483647, %v461
      %v478 = vsub.f32 0.0, %v477
      %v479 = vmul.f32 %v478, 1.442695
      %v480 = vpow.pop %v479
      %v481 = vadd.f32 %v480, 1.0
      %v482 = vlog2.pop %v481
      %v483 = vmul.f32 %v482, 0.6931472
      %v484 = vadd.f32 %v476, %v483
      %v485 = vsub.f32 1.0, %v471
      %v486 = vmul.f32 %v484, %v485
      %487 = vst [vmem:[%s444] sm:$0x3] %v486
      %v488 = vmax.f32 %v465, 0.0
      %v489 = vmul.f32 %v465, %v471
      %v490 = vsub.f32 %v488, %v489
      %v491 = vand.u32 2147483647, %v465
      %v492 = vsub.f32 0.0, %v491
      %v493 = vmul.f32 %v492, 1.442695
      %v494 = vpow.pop %v493
      %v495 = vadd.f32 %v494, 1.0
      %v496 = vlog2.pop %v495
      %v497 = vmul.f32 %v496, 0.6931472
      %v498 = vadd.f32 %v490, %v497
      %v499 = vmul.f32 %v471, %v473
      %v500 = vmul.f32 %v485, %v473
      %v501 = vmul.f32 %v498, %v500
      %502 = vst [vmem:[%s451] sm:$0x3] %v501
      %v503 = vmax.f32 %v467, %v468
      %v504 = vmax.f32 %v503, %v469
      %v505 = vsub.f32 %v467, %v504
      %v506 = vmul.f32 %v505, 1.442695
      %v507 = vpow.pop %v506
      %v508 = vadd.f32 %v507, 0.0
      %vm509 = vcmp.eq.s32.totalorder %v470, 0
      %v510 = vsel %vm509, %v467, 0.0
      %v511 = vadd.f32 %v510, 0.0
      %v512 = vsub.f32 %v468, %v504
      %v513 = vmul.f32 %v512, 1.442695
      %v514 = vpow.pop %v513
      %v515 = vadd.f32 %v508, %v514
      %vm516 = vcmp.eq.s32.totalorder %v470, 1
      %v517 = vsel %vm516, %v468, 0.0
      %v518 = vadd.f32 %v511, %v517
      %v519 = vsub.f32 %v469, %v504
      %v520 = vmul.f32 %v519, 1.442695
      %v521 = vpow.pop %v520
      %v522 = vadd.f32 %v515, %v521
      %vm523 = vcmp.eq.s32.totalorder %v470, 2
      %v524 = vsel %vm523, %v469, 0.0
      %v525 = vadd.f32 %v518, %v524
      %v526 = vlog2.pop %v522
      %v527 = vmul.f32 %v526, 0.6931472
      %v528 = vadd.f32 %v504, %v527
      %v529 = vsub.f32 %v528, %v525
      %vm530 = vcmp.ne.s32.totalorder %v470, 0
      %v531 = vsel %vm530, 1, 0
      %v532 = vcvt.s32.f32 %v531
      %vm533 = vcmask 1041408
      %v534 = vsel %vm533, %v471, 0.0
      %v535 = vrot.slane %v534, 4
      %v536 = vadd.f32 %v534, %v535
      %v537 = vrot.slane %v536, 2
      %v538 = vadd.f32 %v536, %v537
      %v539 = vrot.slane %v538, 1
      %v540 = vadd.f32 %v538, %v539
      %v541 = vsel %vm533, %v485, 0.0
      %v542 = vrot.slane %v541, 4
      %v543 = vadd.f32 %v541, %v542
      %v544 = vrot.slane %v543, 2
      %v545 = vadd.f32 %v543, %v544
      %v546 = vrot.slane %v545, 1
      %v547 = vadd.f32 %v545, %v546
      %v548 = vmul.f32 %v484, %v471
      %v549 = vsel %vm533, %v548, 0.0
      %v550 = vrot.slane %v549, 4
      %v551 = vadd.f32 %v549, %v550
      %v552 = vrot.slane %v551, 2
      %v553 = vadd.f32 %v551, %v552
      %v554 = vrot.slane %v553, 1
      %v555 = vadd.f32 %v553, %v554
      %v556 = vsel %vm533, %v499, 0.0
      %v557 = vrot.slane %v556, 4
      %v558 = vadd.f32 %v556, %v557
      %v559 = vrot.slane %v558, 2
      %v560 = vadd.f32 %v558, %v559
      %v561 = vrot.slane %v560, 1
      %v562 = vadd.f32 %v560, %v561
      %v563 = vsel %vm533, %v500, 0.0
      %v564 = vrot.slane %v563, 4
      %v565 = vadd.f32 %v563, %v564
      %v566 = vrot.slane %v565, 2
      %v567 = vadd.f32 %v565, %v566
      %v568 = vrot.slane %v567, 1
      %v569 = vadd.f32 %v567, %v568
      %v570 = vmul.f32 %v498, %v499
      %v571 = vsel %vm533, %v570, 0.0
      %v572 = vrot.slane %v571, 4
      %v573 = vadd.f32 %v571, %v572
      %v574 = vrot.slane %v573, 2
      %v575 = vadd.f32 %v573, %v574
      %v576 = vrot.slane %v575, 1
      %v577 = vadd.f32 %v575, %v576
      %v578 = vsub.f32 %v463, %v472
      %v579 = vmul.f32 %v578, %v473
      %v580 = vand.u32 2147483647, %v579
      %v581 = vsel %vm533, %v580, 0.0
      %v582 = vrot.slane %v581, 4
      %v583 = vadd.f32 %v581, %v582
      %v584 = vrot.slane %v583, 2
      %v585 = vadd.f32 %v583, %v584
      %v586 = vrot.slane %v585, 1
      %v587 = vadd.f32 %v585, %v586
      %v588 = vsel %vm533, %v473, 0.0
      %v589 = vrot.slane %v588, 4
      %v590 = vadd.f32 %v588, %v589
      %v591 = vrot.slane %v590, 2
      %v592 = vadd.f32 %v590, %v591
      %v593 = vrot.slane %v592, 1
      %v594 = vadd.f32 %v592, %v593
      %v595 = vmul.f32 %v529, %v532
      %v596 = vsel %vm533, %v595, 0.0
      %v597 = vrot.slane %v596, 4
      %v598 = vadd.f32 %v596, %v597
      %v599 = vrot.slane %v598, 2
      %v600 = vadd.f32 %v598, %v599
      %v601 = vrot.slane %v600, 1
      %v602 = vadd.f32 %v600, %v601
      %v603 = vsel %vm533, %v532, 0.0
      %v604 = vrot.slane %v603, 4
      %v605 = vadd.f32 %v603, %v604
      %v606 = vrot.slane %v605, 2
      %v607 = vadd.f32 %v605, %v606
      %v608 = vrot.slane %v607, 1
      %v609 = vadd.f32 %v607, %v608
      %vm610 = vcmask 1040384
      %v611 = vsel %vm610, %v540, %v547
      %v612 = vsel %vm533, %v611, %v555
      %vm613 = vcmask 1042432
      %v614 = vsel %vm613, %v612, %v562
      %vm615 = vcmask 1043456
      %v616 = vsel %vm615, %v614, %v569
      %vm617 = vcmask 1044480
      %v618 = vsel %vm617, %v616, %v577
      %vm619 = vcmask 1045504
      %v620 = vsel %vm619, %v618, %v587
      %vm621 = vcmask 1046528
      %v622 = vsel %vm621, %v620, %v594
      %v623 = vsel %vm610, %v602, %v609
      %v624 = vsel %vm533, %v623, 0.0
      %625 = vst [vmem:[%s460] sm:$0xff] %v622
      %626 = vst [vmem:[%s460 + $0x8] sm:$0xff] %v624
      %p627 = scmp.lt.s32.totalorder %s23, 1
      %s628 = scalar_select %p627, %s23, 1
      %p629 = scmp.lt.s32.totalorder %s24, 0
      %s630 = scalar_select %p629, %s24, 0
      %s631 = sadd.s32 %s630, %s628
      %s632 = smul.addr %s631, 2
      %s633 = scalar_lea.vmem %s5, %s632
      %p634 = scmp.lt.s32.totalorder %s23, 1
      %s635 = scalar_select %p634, %s23, 1
      %p636 = scmp.lt.s32.totalorder %s24, 0
      %s637 = scalar_select %p636, %s24, 0
      %s638 = sadd.s32 %s637, %s635
      %s639 = smul.addr %s638, 2
      %s640 = scalar_lea.vmem %s6, %s639
      %p641 = scmp.lt.s32.totalorder %s23, 1
      %s642 = scalar_select %p641, %s23, 1
      %p643 = scmp.lt.s32.totalorder %s24, 0
      %s644 = scalar_select %p643, %s24, 0
      %s645 = smul.addr %s644, 2
      %s646 = smul.addr %s642, 2
      %s647 = sadd.s32 %s645, %s646
      %s648 = smul.addr %s647, 8
      %s649 = scalar_lea.vmem %s7, %s648
      // Predicated region
      $region41: #{db_loss.1} parent=39 // pred_check
        %p650 = pneg %p191
      $region42: #{db_loss.1} parent=39 // pred_check_branch
        %652 = sbr.rel (%p650) target = $region44
      $region43: #{db_loss.1} parent=39 // pred_region
        _
      $region44: #{db_loss.1} parent=39 // pred_fallthru
        _
      // Predicated region
      $region45: #{db_loss.1} parent=39 // pred_check
        %p653 = pneg %p219
      $region46: #{db_loss.1} parent=39 // pred_check_branch
        %655 = sbr.rel (%p653) target = $region48
      $region47: #{db_loss.1} parent=39 // pred_region
        _
      $region48: #{db_loss.1} parent=39 // pred_fallthru
        _
      // Predicated region
      $region49: #{db_loss.1} parent=39 // pred_check
        %p656 = pneg %p247
      $region50: #{db_loss.1} parent=39 // pred_check_branch
        %658 = sbr.rel (%p656) target = $region52
      $region51: #{db_loss.1} parent=39 // pred_region
        _
      $region52: #{db_loss.1} parent=39 // pred_fallthru
        _
    $region40: #{db_loss.1} parent=5 // pred_fallthru
      _
    %p659 = scmp.le.s32.totalorder 2, %s14
    // Predicated region
    $region53: #{db_loss.1} parent=5 // pred_check
      %p660 = pneg %p659
    $region54: #{db_loss.1} parent=5 // pred_check_branch
      %662 = sbr.rel (%p660) target = $region56
    $region55: #{db_loss.1} parent=5 // pred_region
      %s663 = ssub.s32 %s14, 2
      // Predicated region
      $region57: #{db_loss.1} parent=55 // pred_check
        %p664 = pneg %p197
      $region58: #{db_loss.1} parent=55 // pred_check_branch
        %666 = sbr.rel (%p664) target = $region60
      $region59: #{db_loss.1} parent=55 // pred_region
        %p667 = scmp.lt.s32.totalorder %s25, 1
        %s668 = scalar_select %p667, %s25, 1
        %p669 = scmp.lt.s32.totalorder %s26, 0
        %s670 = scalar_select %p669, %s26, 0
        %s671 = sadd.s32 %s670, %s668
        %s672 = smul.addr %s671, 2
        %s673 = scalar_lea.vmem %s5, %s672
      $region60: #{db_loss.1} parent=55 // pred_fallthru
        _
      // Predicated region
      $region61: #{db_loss.1} parent=55 // pred_check
        %p674 = pneg %p225
      $region62: #{db_loss.1} parent=55 // pred_check_branch
        %676 = sbr.rel (%p674) target = $region64
      $region63: #{db_loss.1} parent=55 // pred_region
        %p677 = scmp.lt.s32.totalorder %s25, 1
        %s678 = scalar_select %p677, %s25, 1
        %p679 = scmp.lt.s32.totalorder %s26, 0
        %s680 = scalar_select %p679, %s26, 0
        %s681 = sadd.s32 %s680, %s678
        %s682 = smul.addr %s681, 2
        %s683 = scalar_lea.vmem %s6, %s682
      $region64: #{db_loss.1} parent=55 // pred_fallthru
        _
      // Predicated region
      $region65: #{db_loss.1} parent=55 // pred_check
        %p684 = pneg %p253
      $region66: #{db_loss.1} parent=55 // pred_check_branch
        %686 = sbr.rel (%p684) target = $region68
      $region67: #{db_loss.1} parent=55 // pred_region
        %p687 = scmp.lt.s32.totalorder %s25, 1
        %s688 = scalar_select %p687, %s25, 1
        %p689 = scmp.lt.s32.totalorder %s26, 0
        %s690 = scalar_select %p689, %s26, 0
        %s691 = smul.addr %s690, 2
        %s692 = smul.addr %s688, 2
        %s693 = sadd.s32 %s691, %s692
        %s694 = smul.addr %s693, 8
        %s695 = scalar_lea.vmem %s7, %s694
      $region68: #{db_loss.1} parent=55 // pred_fallthru
        _
    $region56: #{db_loss.1} parent=5 // pred_fallthru
      _
  $region6: #{db_loss.1} parent=0 // loop_footer
    %s18 = sadd.s32 1, %s14
  $region7: #{db_loss.1} parent=0 // loop_footer_branch
    %13 = sbr.rel target = $region3
  $region8: #{db_loss.1} parent=0 // loop_exit
    _

</llo_original>
